<compile_context>
chip_gen: v5e
topology: v5e:2x2
jax: 0.10.0
libtpu: 0.0.40
codegen_flags: <defaults>
</compile_context>

<pallas_src>
import functools

import jax
import jax.numpy as jnp
from jax import lax
from jax.experimental import pallas as pl
from jax.experimental.pallas import tpu as pltpu
import numpy as np


def _subject_layers_kernel(subj_ref, order_ref, x_ref, w_ref, b_ref, o_ref,
                           *, compute_dtype):
    # x_ref: (1, C, Tt) native dtype | w_ref: (1, D, C) compute_dtype
    # b_ref: (1, D, 1) f32           | o_ref: (1, D, Tt) out dtype
    del subj_ref, order_ref                       # only used by the index_maps
    x = x_ref[0].astype(compute_dtype)            # in-kernel cast: VPU op, no extra HBM pass
    w = w_ref[0]                                  # (D, C), resident across T tiles / same subject
    # Canonical (M,K)x(K,N) MXU feed: contract last dim of LHS with first dim of RHS.
    out = lax.dot_general(w, x, (((1,), (0,)), ((), ())),
                          preferred_element_type=jnp.float32)   # (D, Tt) f32
    o_ref[0] = (out + b_ref[0]).astype(o_ref.dtype)             # bias: lane broadcast over Tt


def _vmem_capacity_bytes():
    """Per-generation VMEM capacity (v5e/v6e: 128 MiB, v7x: 64 MiB); conservative fallback."""
    try:
        info = pltpu.get_tpu_info()
        cap = getattr(info, "vmem_capacity_bytes", None)
        if cap:
            return int(cap)
    except Exception:
        pass
    return 64 * 1024 * 1024


def _choose_t_tile(c, d, t, x_itemsize, out_itemsize, budget_bytes):
    """Largest useful time tile within an honest VMEM budget.

    Counts the double-buffered x and out blocks, the double-buffered weight (bf16)
    and bias (f32) blocks, the f32 matmul result and the in-kernel bf16 copy of x.
    Prefers a single full-T block (fewest grid steps, longest DMAs) when it fits.
    """
    fixed = 2 * d * c * 2 + 2 * d * 4                                  # weights + bias (dbl-buf)
    per_t = 2 * c * x_itemsize + 2 * d * out_itemsize + d * 4 + c * 2  # x, out, f32 acc, bf16 x
    avail = max(budget_bytes - fixed, 0)
    if t <= 128 or per_t * t <= avail:
        return int(t)                       # single block == full dim: always legal
    tt = (avail // per_t) // 128 * 128
    return int(max(128, min(tt, t)))


@functools.partial(jax.jit, static_argnames=("compute_dtype", "out_dtype", "t_tile"))
def subject_layers(x, subjects, weights, biases, *,
                   compute_dtype=jnp.bfloat16, out_dtype=None, t_tile=None):
    """x: (B, C, T), subjects: (B,) int, weights: (S, C, D), biases: (S, 1, D)."""
    B, C, T = x.shape
    S, _, D = weights.shape
    if out_dtype is None:
        out_dtype = x.dtype

    # Clamp untrusted ids (semantic divergence from PyTorch, which would raise), then
    # visit the batch in subject-sorted order so same-subject batch elements are
    # consecutive grid steps (weight block index unchanged => weight/bias DMA elided).
    subjects = jnp.clip(subjects.astype(jnp.int32), 0, S - 1)
    order = jnp.argsort(subjects).astype(jnp.int32)           # grid step -> batch index
    subj_sorted = jnp.take(subjects, order).astype(jnp.int32)

    # Small one-time param relayouts (weights/bias only -- x stays untouched in HBM):
    #   weights -> (S, D, C) compute_dtype: canonical MXU LHS, no per-step relayout.
    #   bias    -> (S, D, 1) f32: in-kernel add is a plain lane broadcast.
    weights = jnp.transpose(weights, (0, 2, 1)).astype(compute_dtype)
    biases = jnp.transpose(biases.astype(jnp.float32), (0, 2, 1))

    # Per-generation VMEM budget and time tile (multiple of 128 unless it covers all of T).
    cap = _vmem_capacity_bytes()
    vmem_limit = min(int(cap * 0.6), 96 * 1024 * 1024)
    tile_budget = int(vmem_limit * 0.8)
    if t_tile is None:
        Tt = _choose_t_tile(C, D, T,
                            jnp.dtype(x.dtype).itemsize,
                            jnp.dtype(out_dtype).itemsize,
                            tile_budget)
    else:
        Tt = int(min(t_tile, T))

    grid = (B, pl.cdiv(T, Tt))   # ragged last T block: input padded, output stores masked

    grid_spec = pltpu.PrefetchScalarGridSpec(
        num_scalar_prefetch=2,   # (subj_sorted, order) land in SMEM, passed to index_maps
        grid=grid,
        in_specs=[
            # x tile: streamed; batch visited in subject-sorted order via order[b].
            # (If profiling shows exposed DMA at small Tt, add pipeline_mode=pl.Buffered(3).)
            pl.BlockSpec((1, C, Tt), lambda b, t, subj, order: (order[b], 0, t)),
            # Per-subject weight / bias: block index depends only on the subject, so they
            # stay resident across all T tiles and across consecutive same-subject batches.
            pl.BlockSpec((1, D, C), lambda b, t, subj, order: (subj[b], 0, 0)),
            pl.BlockSpec((1, D, 1), lambda b, t, subj, order: (subj[b], 0, 0)),
        ],
        out_specs=pl.BlockSpec((1, D, Tt), lambda b, t, subj, order: (order[b], 0, t)),
    )

    bytes_accessed = (B * C * T * jnp.dtype(x.dtype).itemsize
                      + S * D * C * jnp.dtype(compute_dtype).itemsize
                      + S * D * 4
                      + B * D * T * jnp.dtype(out_dtype).itemsize)
    cost = pl.CostEstimate(flops=2 * B * C * D * T, transcendentals=0,
                           bytes_accessed=int(bytes_accessed))

    # TODO(synk): on v7x, confirm megacore assigns contiguous chunks of the sorted B axis
    # per TensorCore; if interleaved, add an explicit core axis split at a subject boundary.
    out = pl.pallas_call(
        functools.partial(_subject_layers_kernel, compute_dtype=compute_dtype),
        out_shape=jax.ShapeDtypeStruct((B, D, T), out_dtype),
        grid_spec=grid_spec,
        compiler_params=pltpu.CompilerParams(
            dimension_semantics=("parallel", "parallel"),
            vmem_limit_bytes=vmem_limit,
        ),
        cost_estimate=cost,
    )(subj_sorted, order, x, weights, biases)
    return out


def init_params(key, n_subjects, in_channels, out_channels, init_id=False):
    """Deterministic parameter init mirroring the PyTorch __init__."""
    # xavier_normal_ on (S, C, D): fan_in = C*D, fan_out = S*D, gain=1.
    fan_in = in_channels * out_channels
    fan_out = n_subjects * out_channels
    std = (2.0 / (fan_in + fan_out)) ** 0.5
    w = jax.random.normal(key, (n_subjects, in_channels, out_channels),
                          dtype=jnp.float32) * std
    if init_id:
        assert in_channels == out_channels
        w = jnp.broadcast_to(jnp.eye(in_channels, dtype=jnp.float32)[None],
                             (n_subjects, in_channels, out_channels))
    w = w * (1.0 / in_channels ** 0.5)
    b = jnp.zeros((n_subjects, 1, out_channels), dtype=jnp.float32)
    return w, b


def _reference(x, subjects, weights, biases):
    """Plain-JAX reference with the same documented bf16 operand cast + f32 accumulation."""
    xr = x.astype(jnp.bfloat16).astype(jnp.float32)
    wg = weights[subjects].astype(jnp.bfloat16).astype(jnp.float32)   # (B, C, D)
    bg = biases[subjects]                                             # (B, 1, D)
    out = jnp.einsum("bct,bcd->bdt", xr, wg, preferred_element_type=jnp.float32)
    return (out + jnp.transpose(bg, (0, 2, 1))).astype(x.dtype)


if __name__ == "__main__":
    key = jax.random.PRNGKey(0)
    k_x1, k_w1, k_s1, k_x2, k_w2, k_b2 = jax.random.split(key, 6)

    # --- Config 1: tiny shapes consistent with the module (B=2, C=4, D=4, T=16). ---
    B, C, D, T, S = 2, 4, 4, 16, 3
    x1 = jax.random.normal(k_x1, (B, C, T), dtype=jnp.float32)
    subj1 = jax.random.randint(k_s1, (B,), 0, S, dtype=jnp.int32)
    w1, b1 = init_params(k_w1, S, C, D)
    out1 = jax.block_until_ready(subject_layers(x1, subj1, w1, b1))
    np.testing.assert_allclose(np.asarray(out1), np.asarray(_reference(x1, subj1, w1, b1)),
                               rtol=1e-3, atol=1e-3)

    # --- Config 2: exercises the ragged last T block (T=300, tile=128), D not a
    # multiple of 8, nonzero bias, and repeated subjects (weight-DMA elision path). ---
    B, C, D, T, S = 5, 7, 6, 300, 3
    x2 = jax.random.normal(k_x2, (B, C, T), dtype=jnp.float32)
    subj2 = jnp.array([2, 0, 2, 2, 1], dtype=jnp.int32)
    w2, _ = init_params(k_w2, S, C, D)
    b2 = 0.1 * jax.random.normal(k_b2, (S, 1, D), dtype=jnp.float32)
    out2 = jax.block_until_ready(subject_layers(x2, subj2, w2, b2, t_tile=128))
    np.testing.assert_allclose(np.asarray(out2), np.asarray(_reference(x2, subj2, w2, b2)),
                               rtol=1e-3, atol=1e-3)

    print("KERNEL_OK")
</pallas_src>

<mosaic_0001>
module attributes {stable_mosaic.version = 11 : i64} {
  func.func @_subject_layers_kernel(%arg0: i32, %arg1: i32, %arg2: memref<2xi32, #tpu.memory_space<smem>>, %arg3: memref<2xi32, #tpu.memory_space<smem>>, %arg4: memref<1x4x16xf32, #tpu.memory_space<vmem>>, %arg5: memref<1x4x4xbf16, #tpu.memory_space<vmem>>, %arg6: memref<1x4x1xf32, #tpu.memory_space<vmem>>, %arg7: memref<1x4x16xf32, #tpu.memory_space<vmem>>) attributes {dimension_semantics = [#tpu.dimension_semantics<parallel>, #tpu.dimension_semantics<parallel>], iteration_bounds = array<i64: 2, 1>, scalar_prefetch = 2 : i64, scratch_operands = 0 : i64, tpu.core_type = #tpu.core_type<tc>, window_params = [{transform_indices = @transform_0, window_bounds = array<i64: 1, 4, 16>}, {transform_indices = @transform_1, window_bounds = array<i64: 1, 4, 4>}, {transform_indices = @transform_2, window_bounds = array<i64: 1, 4, 1>}, {transform_indices = @transform_3, window_bounds = array<i64: 1, 4, 16>}]} {
    %c0 = arith.constant 0 : index
    %c0_0 = arith.constant 0 : index
    %c0_1 = arith.constant 0 : index
    %0 = vector.load %arg4[%c0, %c0_0, %c0_1] : memref<1x4x16xf32, #tpu.memory_space<vmem>>, vector<1x4x16xf32>
    %1 = vector.shape_cast %0 : vector<1x4x16xf32> to vector<4x16xf32>
    %2 = arith.truncf %1 : vector<4x16xf32> to vector<4x16xbf16>
    %c0_2 = arith.constant 0 : index
    %c0_3 = arith.constant 0 : index
    %c0_4 = arith.constant 0 : index
    %3 = vector.load %arg5[%c0_2, %c0_3, %c0_4] : memref<1x4x4xbf16, #tpu.memory_space<vmem>>, vector<1x4x4xbf16>
    %4 = vector.shape_cast %3 : vector<1x4x4xbf16> to vector<4x4xbf16>
    %cst = arith.constant dense<0.000000e+00> : vector<4x16xf32>
    %5 = tpu.matmul %4, %2, %cst {dimension_numbers = #tpu.dot_dimension_numbers<[1], [0], [0], [1], [0, 0, 1, 1], [], []>} : vector<4x4xbf16>, vector<4x16xbf16>, vector<4x16xf32> -> vector<4x16xf32>
    %c0_5 = arith.constant 0 : index
    %c0_6 = arith.constant 0 : index
    %c0_7 = arith.constant 0 : index
    %6 = vector.load %arg6[%c0_5, %c0_6, %c0_7] : memref<1x4x1xf32, #tpu.memory_space<vmem>>, vector<1x4x1xf32>
    %7 = vector.shape_cast %6 : vector<1x4x1xf32> to vector<4x1xf32>
    %8 = vector.broadcast %7 : vector<4x1xf32> to vector<4x16xf32>
    %9 = arith.addf %5, %8 : vector<4x16xf32>
    %c0_8 = arith.constant 0 : index
    %c0_9 = arith.constant 0 : index
    %c0_10 = arith.constant 0 : index
    %10 = vector.load %arg7[%c0_8, %c0_9, %c0_10] : memref<1x4x16xf32, #tpu.memory_space<vmem>>, vector<1x4x16xf32>
    %11 = vector.shape_cast %10 : vector<1x4x16xf32> to vector<4x16xf32>
    %12 = vector.shape_cast %9 : vector<4x16xf32> to vector<1x4x16xf32>
    tpu.vector_store %arg7[%c0_8, %c0_9, %c0_10], %12 {strides = array<i32>} : memref<1x4x16xf32, #tpu.memory_space<vmem>>, vector<1x4x16xf32>,
    return
  }
  func.func @transform_0(%arg0: i32, %arg1: i32, %arg2: memref<2xi32, #tpu.memory_space<smem>>, %arg3: memref<2xi32, #tpu.memory_space<smem>>) -> (i32, i32, i32) {
    %0 = arith.index_cast %arg0 : i32 to index
    %1 = memref.load %arg3[%0] : memref<2xi32, #tpu.memory_space<smem>>
    %c0_i32 = arith.constant 0 : i32
    %c0_i32_0 = arith.constant 0 : i32
    return %1, %c0_i32, %arg1 : i32, i32, i32
  }
  func.func @transform_1(%arg0: i32, %arg1: i32, %arg2: memref<2xi32, #tpu.memory_space<smem>>, %arg3: memref<2xi32, #tpu.memory_space<smem>>) -> (i32, i32, i32) {
    %0 = arith.index_cast %arg0 : i32 to index
    %1 = memref.load %arg2[%0] : memref<2xi32, #tpu.memory_space<smem>>
    %c0_i32 = arith.constant 0 : i32
    %c0_i32_0 = arith.constant 0 : i32
    %c0_i32_1 = arith.constant 0 : i32
    return %1, %c0_i32, %c0_i32_0 : i32, i32, i32
  }
  func.func @transform_2(%arg0: i32, %arg1: i32, %arg2: memref<2xi32, #tpu.memory_space<smem>>, %arg3: memref<2xi32, #tpu.memory_space<smem>>) -> (i32, i32, i32) {
    %0 = arith.index_cast %arg0 : i32 to index
    %1 = memref.load %arg2[%0] : memref<2xi32, #tpu.memory_space<smem>>
    %c0_i32 = arith.constant 0 : i32
    %c0_i32_0 = arith.constant 0 : i32
    %c0_i32_1 = arith.constant 0 : i32
    return %1, %c0_i32, %c0_i32_0 : i32, i32, i32
  }
  func.func @transform_3(%arg0: i32, %arg1: i32, %arg2: memref<2xi32, #tpu.memory_space<smem>>, %arg3: memref<2xi32, #tpu.memory_space<smem>>) -> (i32, i32, i32) {
    %0 = arith.index_cast %arg0 : i32 to index
    %1 = memref.load %arg3[%0] : memref<2xi32, #tpu.memory_space<smem>>
    %c0_i32 = arith.constant 0 : i32
    %c0_i32_0 = arith.constant 0 : i32
    return %1, %c0_i32, %arg1 : i32, i32, i32
  }
}

</mosaic_0001>

<llo_original>
// kernel: subject_layers.1
$region0: #{subject_layers.1}
  #allocation0 [shape = 'u32[]', space=smem, size = 0x4, offset = 0x4, fixed_abs, tag = 'smem constant byte address 0x4 - core index']
  #allocation1 [shape = 'u32[72,128]{1,0:T(1,128)}', space=vmem, size = 0x9000, scoped, tag = 'internal scratch']
  #allocation2 [shape = 's32[1]{0}', space=sflag, size = 0x4, scoped, tag = 'scoped memory for subject_layers.1']
  #allocation3 [shape = 'u8[512]{0}', space=smem, size = 0x200, scoped, tag = 'prefetched SMEM operand 0']
  #allocation4 [shape = 'u8[512]{0}', space=smem, size = 0x200, scoped, tag = 'prefetched SMEM operand 1']
  %s0 = inlined_call_operand.vmem [shape: s32[2], index: 0, kind: input, shape index: {}]
  %s1 = inlined_call_operand.vmem [shape: s32[2], index: 1, kind: input, shape index: {}]
  %s2 = inlined_call_operand.vmem [shape: f32[2,4,16], index: 2, kind: input, shape index: {}]
  %s3 = inlined_call_operand.vmem [shape: bf16[3,4,4], index: 3, kind: input, shape index: {}]
  %s4 = inlined_call_operand.vmem [shape: f32[3,4,1], index: 4, kind: input, shape index: {}]
  %s5 = inlined_call_operand.hbm [shape: f32[2,4,16], index: 5, kind: output, shape index: {}]
  %s6 = sld [smem:[#allocation0]]
  $region45: #{subject_layers.1} parent=0
    _
  %s8 = ssub.s32 1, %s6
  %s9 = scalar_select 0, %s8, %s6
  %s11 = sshll.u32 %s0, 4
  %s12 = int_to_ptr.vmem [resolvable:$true] %s11
  %14 = dma.vmem_to_smem %s12, 16, [#allocation3], [#allocation2]
  %s16 = sshll.u32 %s1, 4
  %s17 = int_to_ptr.vmem [resolvable:$true] %s16
  %19 = dma.vmem_to_smem %s17, 16, [#allocation4], [#allocation2]
  %21 = dma.done [#allocation2], 32
  %22 = sfence
  $region1: #{subject_layers.1} parent=0
    #allocation5 [shape = 'u8[4096]{0}', space=vmem, size = 0x1000, scoped, tag = 'output window, operand 0']
    #allocation6 [shape = 's32[2]{0}', space=sflag, size = 0x8, scoped, tag = 'scoped memory for subject_layers.1']
    %23 = vsyncpa [#allocation6], 0
    %s24 = scalar_lea.sflag [#allocation6], 1
    %25 = vsyncpa %s24, 0
    loop: start=0, step=1, limit=4
    $region2: #{subject_layers.1} parent=1 // loop_pre_header
      _
    $region3: #{subject_layers.1} parent=1 // loop_header
      %s27 = sphi 0, %s31
      %p28 = scmp.ge.s32.totalorder %s27, 4
      %s34 = sphi 0, %s46
      %s35 = sphi 0, %s42
      %s36 = sphi 0, %s34
      %s37 = sphi 0, %s35
      %s38 = sphi 0, %s36
      %s39 = sphi 0, %s37
      %s53 = sphi 0, %s55
      %s56 = sphi 0, %s53
      %s57 = sphi 0, %s56
      %s73 = sphi 0, %s57
      %s81 = sphi 0, %s83
      %s84 = sphi 0, %s81
      %s85 = sphi 0, %s84
      %s101 = sphi 0, %s85
      %s109 = sphi 0, %s111
      %s112 = sphi 0, %s109
      %s113 = sphi 0, %s112
      %s129 = sphi 0, %s113
      %s139 = sphi 0, %s141
      %s142 = sphi 0, %s139
      %s143 = sphi 0, %s142
      %s159 = sphi 0, %s143
    $region4: #{subject_layers.1} parent=1 // loop_header_branch
      %30 = sbr.rel (%p28) target = $region8
    $region5: #{subject_layers.1} parent=1 // loop_body
      %s32 = ssub.s32 %s27, 1
      %s33 = ssub.s32 %s27, 2
      %s40 = sadd.s32 1, %s35
      %p41 = scmp.ge.s32.totalorder %s40, 1
      %s42 = scalar_select %p41, 0, %s40
      %s43 = sadd.s32 1, %s34
      %s44 = scalar_select %p41, %s43, %s34
      %p45 = scmp.ge.s32.totalorder %s44, 2
      %s46 = scalar_select %p45, 0, %s44
      %s47 = sld [smem:[#allocation4 + %s34]]
      %s48 = sld [smem:[#allocation4 + %s46]]
      %s49 = ssub.s32 %s47, %s48
      %s50 = ssub.s32 %s35, %s42
      %s51 = sor.u32 %s49, %s50
      %p52 = scmp.eq.s32.totalorder %s51, 0
      %s54 = sadd.s32 %s53, 1
      %s55 = scalar_select %p52, %s53, %s54
      %p58 = pneg %p52
      %p59 = scmp.eq.s32.totalorder %s27, 1
      %p60 = por %p58, %p59
      %p61 = scmp.ne.s32.totalorder %s53, %s56
      %p62 = scmp.eq.s32.totalorder %s27, 0
      %p63 = por %p61, %p62
      %p64 = scmp.ne.s32.totalorder %s53, %s56
      %p65 = scmp.eq.s32.totalorder %s32, 1
      %p66 = por %p64, %p65
      %p67 = scmp.ne.s32.totalorder %s56, %s57
      %p68 = scmp.eq.s32.totalorder %s32, 0
      %p69 = por %p67, %p68
      %p70 = scmp.ne.s32.totalorder %s56, %s57
      %p71 = scmp.eq.s32.totalorder %s33, 1
      %p72 = por %p70, %p71
      %p74 = scmp.ne.s32.totalorder %s57, %s73
      %p75 = scmp.eq.s32.totalorder %s33, 0
      %p76 = por %p74, %p75
      %s77 = sld [smem:[#allocation3 + %s34]]
      %s78 = sld [smem:[#allocation3 + %s46]]
      %s79 = ssub.s32 %s77, %s78
      %p80 = scmp.eq.s32.totalorder %s79, 0
      %s82 = sadd.s32 %s81, 1
      %s83 = scalar_select %p80, %s81, %s82
      %p86 = pneg %p80
      %p87 = scmp.eq.s32.totalorder %s27, 1
      %p88 = por %p86, %p87
      %p89 = scmp.ne.s32.totalorder %s81, %s84
      %p90 = scmp.eq.s32.totalorder %s27, 0
      %p91 = por %p89, %p90
      %p92 = scmp.ne.s32.totalorder %s81, %s84
      %p93 = scmp.eq.s32.totalorder %s32, 1
      %p94 = por %p92, %p93
      %p95 = scmp.ne.s32.totalorder %s84, %s85
      %p96 = scmp.eq.s32.totalorder %s32, 0
      %p97 = por %p95, %p96
      %p98 = scmp.ne.s32.totalorder %s84, %s85
      %p99 = scmp.eq.s32.totalorder %s33, 1
      %p100 = por %p98, %p99
      %p102 = scmp.ne.s32.totalorder %s85, %s101
      %p103 = scmp.eq.s32.totalorder %s33, 0
      %p104 = por %p102, %p103
      %s105 = sld [smem:[#allocation3 + %s34]]
      %s106 = sld [smem:[#allocation3 + %s46]]
      %s107 = ssub.s32 %s105, %s106
      %p108 = scmp.eq.s32.totalorder %s107, 0
      %s110 = sadd.s32 %s109, 1
      %s111 = scalar_select %p108, %s109, %s110
      %p114 = pneg %p108
      %p115 = scmp.eq.s32.totalorder %s27, 1
      %p116 = por %p114, %p115
      %p117 = scmp.ne.s32.totalorder %s109, %s112
      %p118 = scmp.eq.s32.totalorder %s27, 0
      %p119 = por %p117, %p118
      %p120 = scmp.ne.s32.totalorder %s109, %s112
      %p121 = scmp.eq.s32.totalorder %s32, 1
      %p122 = por %p120, %p121
      %p123 = scmp.ne.s32.totalorder %s112, %s113
      %p124 = scmp.eq.s32.totalorder %s32, 0
      %p125 = por %p123, %p124
      %p126 = scmp.ne.s32.totalorder %s112, %s113
      %p127 = scmp.eq.s32.totalorder %s33, 1
      %p128 = por %p126, %p127
      %p130 = scmp.ne.s32.totalorder %s113, %s129
      %p131 = scmp.eq.s32.totalorder %s33, 0
      %p132 = por %p130, %p131
      %s133 = sld [smem:[#allocation4 + %s34]]
      %s134 = sld [smem:[#allocation4 + %s46]]
      %s135 = ssub.s32 %s133, %s134
      %s136 = ssub.s32 %s35, %s42
      %s137 = sor.u32 %s135, %s136
      %p138 = scmp.eq.s32.totalorder %s137, 0
      %s140 = sadd.s32 %s139, 1
      %s141 = scalar_select %p138, %s139, %s140
      %p144 = pneg %p138
      %p145 = scmp.eq.s32.totalorder %s27, 1
      %p146 = por %p144, %p145
      %p147 = scmp.ne.s32.totalorder %s139, %s142
      %p148 = scmp.eq.s32.totalorder %s27, 0
      %p149 = por %p147, %p148
      %p150 = scmp.ne.s32.totalorder %s139, %s142
      %p151 = scmp.eq.s32.totalorder %s32, 1
      %p152 = por %p150, %p151
      %p153 = scmp.ne.s32.totalorder %s142, %s143
      %p154 = scmp.eq.s32.totalorder %s32, 0
      %p155 = por %p153, %p154
      %p156 = scmp.ne.s32.totalorder %s142, %s143
      %p157 = scmp.eq.s32.totalorder %s33, 1
      %p158 = por %p156, %p157
      %p160 = scmp.ne.s32.totalorder %s143, %s159
      %p161 = scmp.eq.s32.totalorder %s33, 0
      %p162 = por %p160, %p161
      %p163 = scmp.le.s32.totalorder 1, %s27
      %p164 = scmp.lt.s32.totalorder %s27, 3
      %p165 = pnand %p163, %p164
      %p166 = pneg %p165
      // Predicated region
      $region9: #{subject_layers.1} parent=5 // pred_check
        _
      $region10: #{subject_layers.1} parent=5 // pred_check_branch
        %168 = sbr.rel (%p165) target = $region12
      $region11: #{subject_layers.1} parent=5 // pred_region
        %s169 = ssub.s32 %s27, 1
      $region12: #{subject_layers.1} parent=5 // pred_fallthru
        _
      %p170 = scmp.lt.s32.totalorder %s27, 2
      // Predicated region
      $region13: #{subject_layers.1} parent=5 // pred_check
        %p171 = pneg %p170
      $region14: #{subject_layers.1} parent=5 // pred_check_branch
        %173 = sbr.rel (%p171) target = $region16
      $region15: #{subject_layers.1} parent=5 // pred_region
        // Predicated region
        $region17: #{subject_layers.1} parent=15 // pred_check
          %p174 = pneg %p63
        $region18: #{subject_layers.1} parent=15 // pred_check_branch
          %176 = sbr.rel (%p174) target = $region20
        $region19: #{subject_layers.1} parent=15 // pred_region
          %s177 = sld [smem:[#allocation4 + %s34]]
          %p178 = scmp.lt.s32.totalorder %s177, 1
          %s179 = scalar_select %p178, %s177, 1
          %p180 = scmp.lt.s32.totalorder %s35, 0
          %s181 = scalar_select %p180, %s35, 0
          %s182 = sadd.s32 %s181, %s179
          %s183 = smul.addr %s182, 4
          %s184 = scalar_lea.vmem %s2, %s183
          %s185 = sld [smem:[#allocation4 + %s34]]
        $region20: #{subject_layers.1} parent=15 // pred_fallthru
          _
        // Predicated region
        $region21: #{subject_layers.1} parent=15 // pred_check
          %p186 = pneg %p91
        $region22: #{subject_layers.1} parent=15 // pred_check_branch
          %188 = sbr.rel (%p186) target = $region24
        $region23: #{subject_layers.1} parent=15 // pred_region
          %s189 = sld [smem:[#allocation3 + %s34]]
          %p190 = scmp.lt.s32.totalorder %s189, 2
          %s191 = scalar_select %p190, %s189, 2
          %s192 = smul.addr %s191, 2
          %s193 = scalar_lea.vmem %s3, %s192
          %s194 = sld [smem:[#allocation3 + %s34]]
        $region24: #{subject_layers.1} parent=15 // pred_fallthru
          _
        // Predicated region
        $region25: #{subject_layers.1} parent=15 // pred_check
          %p195 = pneg %p119
        $region26: #{subject_layers.1} parent=15 // pred_check_branch
          %197 = sbr.rel (%p195) target = $region28
        $region27: #{subject_layers.1} parent=15 // pred_region
          %s198 = sld [smem:[#allocation3 + %s34]]
          %p199 = scmp.lt.s32.totalorder %s198, 2
          %s200 = scalar_select %p199, %s198, 2
          %s201 = smul.addr %s200, 4
          %s202 = scalar_lea.vmem %s4, %s201
          %s203 = sld [smem:[#allocation3 + %s34]]
        $region28: #{subject_layers.1} parent=15 // pred_fallthru
          _
      $region16: #{subject_layers.1} parent=5 // pred_fallthru
        _
      %p204 = scmp.le.s32.totalorder 1, %s27
      %p205 = scmp.lt.s32.totalorder %s27, 3
      %p206 = pnand %p204, %p205
      %p207 = pneg %p206
      // Predicated region
      $region29: #{subject_layers.1} parent=5 // pred_check
        _
      $region30: #{subject_layers.1} parent=5 // pred_check_branch
        %209 = sbr.rel (%p206) target = $region32
      $region31: #{subject_layers.1} parent=5 // pred_region
        %s210 = ssub.s32 %s27, 1
        %s211 = sld [smem:[#allocation4 + %s36]]
        %p212 = scmp.lt.s32.totalorder %s211, 1
        %s213 = scalar_select %p212, %s211, 1
        %p214 = scmp.lt.s32.totalorder %s37, 0
        %s215 = scalar_select %p214, %s37, 0
        %s216 = sadd.s32 %s215, %s213
        %s217 = smul.addr %s216, 4
        %s218 = scalar_lea.vmem %s2, %s217
        %p219 = pneg %p69
        %p220 = pneg %p66
        %s221 = sld [smem:[#allocation3 + %s36]]
        %p222 = scmp.lt.s32.totalorder %s221, 2
        %s223 = scalar_select %p222, %s221, 2
        %s224 = smul.addr %s223, 2
        %s225 = scalar_lea.vmem %s3, %s224
        %p226 = pneg %p97
        %p227 = pneg %p94
        %s228 = sld [smem:[#allocation3 + %s36]]
        %p229 = scmp.lt.s32.totalorder %s228, 2
        %s230 = scalar_select %p229, %s228, 2
        %s231 = smul.addr %s230, 4
        %s232 = scalar_lea.vmem %s4, %s231
        %p233 = pneg %p125
        %p234 = pneg %p122
        %p235 = pneg %p155
        %p236 = pneg %p152
        %s237 = sand.u32 %s142, 1
        %s238 = scalar_lea.sflag [#allocation6], %s237
        %s239 = sand.u32 %s142, 1
        %s240 = smul.addr %s239, 4
        %s241 = scalar_lea.vmem [#allocation5], %s240
        %s242 = sld [smem:[#allocation4 + %s36]]
        %p243 = scmp.lt.s32.totalorder %s242, 1
        %s244 = scalar_select %p243, %s242, 1
        %p245 = scmp.lt.s32.totalorder %s37, 0
        %s246 = scalar_select %p245, %s37, 0
        %s247 = sadd.s32 %s246, %s244
        %s248 = smul.addr %s247, 4
        %s249 = scalar_lea.vmem %s2, %s248
        %s250 = sld [smem:[#allocation4 + %s36]]
        %s251 = sld [smem:[#allocation3 + %s36]]
        %p252 = scmp.lt.s32.totalorder %s251, 2
        %s253 = scalar_select %p252, %s251, 2
        %s254 = smul.addr %s253, 2
        %s255 = scalar_lea.vmem %s3, %s254
        %s256 = sld [smem:[#allocation3 + %s36]]
        %s257 = sld [smem:[#allocation3 + %s36]]
        %p258 = scmp.lt.s32.totalorder %s257, 2
        %s259 = scalar_select %p258, %s257, 2
        %s260 = smul.addr %s259, 4
        %s261 = scalar_lea.vmem %s4, %s260
        %s262 = sld [smem:[#allocation3 + %s36]]
        %s263 = sld [smem:[#allocation4 + %s36]]
        %v265 = vld [vmem:[%s249] sm:$0xf]
        %v266 = vpack.c.bf16 %v265, %v265
        %v267 = vld [vmem:[%s255] sm:$0x3]
        %v268 = vld [vmem:[%s261] sm:$0xf]
        %270 = vset.pattern.permute.xlu0 0
        %271 = vperm.xlu0 %270, %v268
        %v272 = vpop.permute.xlu0 %271
        %vm274 = vcmask 31744
        %v276 = vsel %vm274, %v267, 0
        %vm278 = vcmask 1041408
        %v280 = vsel %vm278, %v266, 0
        %282 = vmatpush.bf16.msra.mxu0 0
        %283 = vmatpush.bf16.msra.mxu0 0
        %284 = vmatpush.bf16.msra.mxu0 0
        %285 = vmatpush.bf16.msra.mxu0 0
        %286 = vmatpush.bf16.msra.mxu0 0
        %287 = vmatpush.bf16.msra.mxu0 0
        %288 = vmatpush.bf16.msra.mxu0 0
        %289 = vmatpush.bf16.msra.mxu0 %v280
        %290 = vmatmul.bf16.gmra.mxu0 %v276
        %v291 = vpop.f32.mrf.mxu0
        %v292 = vadd.f32 %v272, %v291
        %v293 = vpop.f32.mrf.mxu0
        %294 = vdwg.mxu0
        %vm295 = vcmask 125952
        %296 = vst.msk [vmem:[%s241] sm:$0xf] %vm295, %v292
        %s297 = sand.u32 %s142, 1
        %s298 = scalar_lea.sflag [#allocation6], %s297
        %s299 = sand.u32 %s142, 1
        %s300 = smul.addr %s299, 4
        %s301 = scalar_lea.vmem [#allocation5], %s300
        // Predicated region
        $region33: #{subject_layers.1} parent=31 // pred_check
          %p302 = pneg %p152
        $region34: #{subject_layers.1} parent=31 // pred_check_branch
          %304 = sbr.rel (%p302) target = $region36
        $region35: #{subject_layers.1} parent=31 // pred_region
          %s305 = sld [smem:[#allocation4 + %s36]]
          %307 = vsyncadd %s298, 0
          %s308 = sadd.s32 %s37, %s305
          %s309 = smul.addr %s308, 4
          %s310 = scalar_lea.hbm %s5, %s309
          %s312 = sshll.u32 %s301, 4
          %s313 = int_to_ptr.vmem [resolvable:$true] %s312
          %s314 = sshll.u32 %s310, 4
          %s315 = int_to_ptr.hbm [resolvable:$true] %s314
          %317 = dma.vmem_to_hbm [thread:$0]  %s313, 64, %s315, %s298
        $region36: #{subject_layers.1} parent=31 // pred_fallthru
          _
      $region32: #{subject_layers.1} parent=5 // pred_fallthru
        _
      %p318 = scmp.le.s32.totalorder 2, %s27
      // Predicated region
      $region37: #{subject_layers.1} parent=5 // pred_check
        %p319 = pneg %p318
      $region38: #{subject_layers.1} parent=5 // pred_check_branch
        %321 = sbr.rel (%p319) target = $region40
      $region39: #{subject_layers.1} parent=5 // pred_region
        %s322 = ssub.s32 %s27, 2
        // Predicated region
        $region41: #{subject_layers.1} parent=39 // pred_check
          %p323 = pneg %p158
        $region42: #{subject_layers.1} parent=39 // pred_check_branch
          %325 = sbr.rel (%p323) target = $region44
        $region43: #{subject_layers.1} parent=39 // pred_region
          %s326 = sand.u32 %s143, 1
          %s327 = scalar_lea.sflag [#allocation6], %s326
          %s328 = sand.u32 %s143, 1
          %s329 = smul.addr %s328, 4
          %s330 = scalar_lea.vmem [#allocation5], %s329
          %332 = dma.done %s327, 64
        $region44: #{subject_layers.1} parent=39 // pred_fallthru
          _
      $region40: #{subject_layers.1} parent=5 // pred_fallthru
        _
    $region6: #{subject_layers.1} parent=1 // loop_footer
      %s31 = sadd.s32 1, %s27
    $region7: #{subject_layers.1} parent=1 // loop_footer_branch
      %26 = sbr.rel target = $region3
    $region8: #{subject_layers.1} parent=1 // loop_exit
      _
    %333 = vsyncpa [#allocation6], 1
    %s334 = scalar_lea.sflag [#allocation6], 1
    %335 = vsyncpa %s334, 1

</llo_original>
